<compile_context>
chip_gen: v5e
topology: v5e:2x2
jax: 0.10.0
libtpu: 0.0.40
codegen_flags: <defaults>
</compile_context>

<pallas_src>
import functools

import jax
import jax.numpy as jnp
from jax import lax
from jax.experimental import pallas as pl
from jax.experimental.pallas import tpu as pltpu

K_IN = 8          # Linear in_features
N_OUT = 6         # Linear out_features
LANES = 128       # TPU lane width
R_CHUNK = 16      # sublane rows per in-kernel strip-mine step (2 vregs / slab)
MAX_BLOCK_ROWS = 512  # rows of 128 lanes per grid step (65536 batch elems)

NEGATIVE_SLOPE = 0.01


def _linear_leaky_kernel(x_ref, w_ref, b_ref, o_ref, *, negative_slope):
    """One grid step.

    x_ref: (K_IN, r_blk, 128)  VMEM  -- batch on (sublane, lane), fully dense
    w_ref: (K_IN, N_OUT)       SMEM  -- scalar weights (w[k, n])
    b_ref: (1, N_OUT)          SMEM  -- scalar bias
    o_ref: (N_OUT, r_blk, 128) VMEM
    """
    r_blk = x_ref.shape[1]
    num_chunks = r_blk // R_CHUNK

    def chunk(c, carry):
        r = pl.multiple_of(c * R_CHUNK, R_CHUNK)
        rows = pl.ds(r, R_CHUNK)
        # Unrolled N and K loops: for each output feature, the whole K=8
        # scalar-MAC reduction and the leaky-relu select finish in vregs,
        # followed by one dense (R_CHUNK, 128) store.
        for n in range(N_OUT):
            acc = x_ref[0, rows, :] * w_ref[0, n] + b_ref[0, n]
            for k in range(1, K_IN):
                acc = acc + x_ref[k, rows, :] * w_ref[k, n]
            o_ref[n, rows, :] = jnp.where(
                acc > 0.0, acc, acc * negative_slope
            ).astype(o_ref.dtype)
        return carry

    lax.fori_loop(0, num_chunks, chunk, 0)


def _round_up(a, b):
    return ((a + b - 1) // b) * b


@functools.partial(jax.jit, static_argnames=("negative_slope",))
def linear_leaky(x, w, b, *, negative_slope=NEGATIVE_SLOPE):
    """x: (B, 8) f32; w: (6, 8) torch-Linear layout; b: (6,). Returns (B, 6)."""
    B, k_in = x.shape
    n_out, _ = w.shape

    # ---- wrapper-side layout plumbing (cheap transpose, free reshapes) ----
    rows_needed = pl.cdiv(B, LANES)
    r_blk = min(MAX_BLOCK_ROWS, _round_up(rows_needed, R_CHUNK))
    total_rows = _round_up(rows_needed, r_blk)
    b_pad = total_rows * LANES
    grid = (total_rows // r_blk,)

    xt = x.T.astype(jnp.float32)                      # (8, B): batch on lanes
    if b_pad != B:
        xt = jnp.pad(xt, ((0, 0), (0, b_pad - B)))    # zero-pad the batch
    x3d = xt.reshape(k_in, total_rows, LANES)         # free reshape

    w_kn = w.T.astype(jnp.float32)                    # (8, 6) scalars for SMEM
    b_2d = b.reshape(1, n_out).astype(jnp.float32)    # (1, 6) scalars for SMEM

    kernel = functools.partial(_linear_leaky_kernel, negative_slope=negative_slope)

    out3d = pl.pallas_call(
        kernel,
        out_shape=jax.ShapeDtypeStruct((n_out, total_rows, LANES), jnp.float32),
        grid=grid,
        in_specs=[
            pl.BlockSpec((k_in, r_blk, LANES), lambda i: (0, i, 0)),  # x tile
            pl.BlockSpec(memory_space=pltpu.MemorySpace.SMEM),        # weights
            pl.BlockSpec(memory_space=pltpu.MemorySpace.SMEM),        # bias
        ],
        out_specs=pl.BlockSpec((n_out, r_blk, LANES), lambda i: (0, i, 0)),
        compiler_params=pltpu.CompilerParams(
            dimension_semantics=("parallel",),        # shards blocks across TCs
        ),
    )(x3d, w_kn, b_2d)

    # Free reshape + slice off batch padding + transpose back to (B, 6).
    out = out3d.reshape(n_out, b_pad)[:, :B].T
    return out.astype(x.dtype)


if __name__ == "__main__":
    key = jax.random.PRNGKey(0)
    kx, kw, kb, kx2 = jax.random.split(key, 4)

    # Deterministic Linear(8, 6) parameters (PyTorch-style uniform init bound).
    bound = 1.0 / jnp.sqrt(8.0)
    w = jax.random.uniform(kw, (N_OUT, K_IN), jnp.float32, -bound, bound)
    b = jax.random.uniform(kb, (N_OUT,), jnp.float32, -bound, bound)

    def reference(x):
        v1 = x @ w.T + b
        return jnp.where(v1 > 0, v1, v1 * NEGATIVE_SLOPE)

    # Literal shape from the PyTorch script: x1 = torch.randn(1, 8).
    x1 = jax.random.normal(kx, (1, K_IN), dtype=jnp.float32)
    out1 = linear_leaky(x1, w, b)
    jax.block_until_ready(out1)
    assert out1.shape == (1, N_OUT)
    assert jnp.allclose(out1, reference(x1), atol=1e-5, rtol=1e-5)

    # Small batched case exercising the tiled / padded path.
    x2 = jax.random.normal(kx2, (256, K_IN), dtype=jnp.float32)
    out2 = linear_leaky(x2, w, b)
    jax.block_until_ready(out2)
    assert out2.shape == (256, N_OUT)
    assert jnp.allclose(out2, reference(x2), atol=1e-5, rtol=1e-5)

    print("KERNEL_OK")
</pallas_src>

<mosaic_0001>
module attributes {stable_mosaic.version = 11 : i64} {
  func.func @_linear_leaky_kernel(%arg0: i32, %arg1: memref<8x16x128xf32, #tpu.memory_space<vmem>>, %arg2: memref<8x6xf32, #tpu.memory_space<smem>>, %arg3: memref<1x6xf32, #tpu.memory_space<smem>>, %arg4: memref<6x16x128xf32, #tpu.memory_space<vmem>>) attributes {dimension_semantics = [#tpu.dimension_semantics<parallel>], iteration_bounds = array<i64: 1>, scalar_prefetch = 0 : i64, scratch_operands = 0 : i64, tpu.core_type = #tpu.core_type<tc>, window_params = [{transform_indices = @transform_0, window_bounds = array<i64: 8, 16, 128>}, {transform_indices = @transform_1, window_bounds = array<i64: 8, 6>}, {transform_indices = @transform_2, window_bounds = array<i64: 1, 6>}, {transform_indices = @transform_3, window_bounds = array<i64: 6, 16, 128>}]} {
    %c0_i32 = arith.constant 0 : i32
    %c16_i32 = arith.constant 16 : i32
    %0 = arith.muli %c0_i32, %c16_i32 : i32
    %1 = tpu.assume_multiple %0, 16 : i32
    %c0 = arith.constant 0 : index
    %2 = arith.index_cast %1 : i32 to index
    %c0_0 = arith.constant 0 : index
    %3 = vector.load %arg1[%c0, %2, %c0_0] : memref<8x16x128xf32, #tpu.memory_space<vmem>>, vector<1x16x128xf32>
    %4 = vector.shape_cast %3 : vector<1x16x128xf32> to vector<16x128xf32>
    %c0_1 = arith.constant 0 : index
    %c0_2 = arith.constant 0 : index
    %5 = memref.load %arg2[%c0_1, %c0_2] : memref<8x6xf32, #tpu.memory_space<smem>>
    %6 = vector.broadcast %5 : f32 to vector<16x128xf32>
    %7 = arith.mulf %4, %6 : vector<16x128xf32>
    %c0_3 = arith.constant 0 : index
    %c0_4 = arith.constant 0 : index
    %8 = memref.load %arg3[%c0_3, %c0_4] : memref<1x6xf32, #tpu.memory_space<smem>>
    %9 = vector.broadcast %8 : f32 to vector<16x128xf32>
    %10 = arith.addf %7, %9 : vector<16x128xf32>
    %c1 = arith.constant 1 : index
    %11 = arith.index_cast %1 : i32 to index
    %c0_5 = arith.constant 0 : index
    %12 = vector.load %arg1[%c1, %11, %c0_5] : memref<8x16x128xf32, #tpu.memory_space<vmem>>, vector<1x16x128xf32>
    %13 = vector.shape_cast %12 : vector<1x16x128xf32> to vector<16x128xf32>
    %c1_6 = arith.constant 1 : index
    %c0_7 = arith.constant 0 : index
    %14 = memref.load %arg2[%c1_6, %c0_7] : memref<8x6xf32, #tpu.memory_space<smem>>
    %15 = vector.broadcast %14 : f32 to vector<16x128xf32>
    %16 = arith.mulf %13, %15 : vector<16x128xf32>
    %17 = arith.addf %10, %16 : vector<16x128xf32>
    %c2 = arith.constant 2 : index
    %18 = arith.index_cast %1 : i32 to index
    %c0_8 = arith.constant 0 : index
    %19 = vector.load %arg1[%c2, %18, %c0_8] : memref<8x16x128xf32, #tpu.memory_space<vmem>>, vector<1x16x128xf32>
    %20 = vector.shape_cast %19 : vector<1x16x128xf32> to vector<16x128xf32>
    %c2_9 = arith.constant 2 : index
    %c0_10 = arith.constant 0 : index
    %21 = memref.load %arg2[%c2_9, %c0_10] : memref<8x6xf32, #tpu.memory_space<smem>>
    %22 = vector.broadcast %21 : f32 to vector<16x128xf32>
    %23 = arith.mulf %20, %22 : vector<16x128xf32>
    %24 = arith.addf %17, %23 : vector<16x128xf32>
    %c3 = arith.constant 3 : index
    %25 = arith.index_cast %1 : i32 to index
    %c0_11 = arith.constant 0 : index
    %26 = vector.load %arg1[%c3, %25, %c0_11] : memref<8x16x128xf32, #tpu.memory_space<vmem>>, vector<1x16x128xf32>
    %27 = vector.shape_cast %26 : vector<1x16x128xf32> to vector<16x128xf32>
    %c3_12 = arith.constant 3 : index
    %c0_13 = arith.constant 0 : index
    %28 = memref.load %arg2[%c3_12, %c0_13] : memref<8x6xf32, #tpu.memory_space<smem>>
    %29 = vector.broadcast %28 : f32 to vector<16x128xf32>
    %30 = arith.mulf %27, %29 : vector<16x128xf32>
    %31 = arith.addf %24, %30 : vector<16x128xf32>
    %c4 = arith.constant 4 : index
    %32 = arith.index_cast %1 : i32 to index
    %c0_14 = arith.constant 0 : index
    %33 = vector.load %arg1[%c4, %32, %c0_14] : memref<8x16x128xf32, #tpu.memory_space<vmem>>, vector<1x16x128xf32>
    %34 = vector.shape_cast %33 : vector<1x16x128xf32> to vector<16x128xf32>
    %c4_15 = arith.constant 4 : index
    %c0_16 = arith.constant 0 : index
    %35 = memref.load %arg2[%c4_15, %c0_16] : memref<8x6xf32, #tpu.memory_space<smem>>
    %36 = vector.broadcast %35 : f32 to vector<16x128xf32>
    %37 = arith.mulf %34, %36 : vector<16x128xf32>
    %38 = arith.addf %31, %37 : vector<16x128xf32>
    %c5 = arith.constant 5 : index
    %39 = arith.index_cast %1 : i32 to index
    %c0_17 = arith.constant 0 : index
    %40 = vector.load %arg1[%c5, %39, %c0_17] : memref<8x16x128xf32, #tpu.memory_space<vmem>>, vector<1x16x128xf32>
    %41 = vector.shape_cast %40 : vector<1x16x128xf32> to vector<16x128xf32>
    %c5_18 = arith.constant 5 : index
    %c0_19 = arith.constant 0 : index
    %42 = memref.load %arg2[%c5_18, %c0_19] : memref<8x6xf32, #tpu.memory_space<smem>>
    %43 = vector.broadcast %42 : f32 to vector<16x128xf32>
    %44 = arith.mulf %41, %43 : vector<16x128xf32>
    %45 = arith.addf %38, %44 : vector<16x128xf32>
    %c6 = arith.constant 6 : index
    %46 = arith.index_cast %1 : i32 to index
    %c0_20 = arith.constant 0 : index
    %47 = vector.load %arg1[%c6, %46, %c0_20] : memref<8x16x128xf32, #tpu.memory_space<vmem>>, vector<1x16x128xf32>
    %48 = vector.shape_cast %47 : vector<1x16x128xf32> to vector<16x128xf32>
    %c6_21 = arith.constant 6 : index
    %c0_22 = arith.constant 0 : index
    %49 = memref.load %arg2[%c6_21, %c0_22] : memref<8x6xf32, #tpu.memory_space<smem>>
    %50 = vector.broadcast %49 : f32 to vector<16x128xf32>
    %51 = arith.mulf %48, %50 : vector<16x128xf32>
    %52 = arith.addf %45, %51 : vector<16x128xf32>
    %c7 = arith.constant 7 : index
    %53 = arith.index_cast %1 : i32 to index
    %c0_23 = arith.constant 0 : index
    %54 = vector.load %arg1[%c7, %53, %c0_23] : memref<8x16x128xf32, #tpu.memory_space<vmem>>, vector<1x16x128xf32>
    %55 = vector.shape_cast %54 : vector<1x16x128xf32> to vector<16x128xf32>
    %c7_24 = arith.constant 7 : index
    %c0_25 = arith.constant 0 : index
    %56 = memref.load %arg2[%c7_24, %c0_25] : memref<8x6xf32, #tpu.memory_space<smem>>
    %57 = vector.broadcast %56 : f32 to vector<16x128xf32>
    %58 = arith.mulf %55, %57 : vector<16x128xf32>
    %59 = arith.addf %52, %58 : vector<16x128xf32>
    %cst = arith.constant 0.000000e+00 : f32
    %60 = vector.broadcast %cst : f32 to vector<16x128xf32>
    %61 = arith.cmpf ogt, %59, %60 : vector<16x128xf32>
    %cst_26 = arith.constant 0.00999999977 : f32
    %62 = vector.broadcast %cst_26 : f32 to vector<16x128xf32>
    %63 = arith.mulf %59, %62 : vector<16x128xf32>
    %64 = arith.select %61, %59, %63 : vector<16x128xi1>, vector<16x128xf32>
    %c0_27 = arith.constant 0 : index
    %65 = arith.index_cast %1 : i32 to index
    %c0_28 = arith.constant 0 : index
    %66 = vector.load %arg4[%c0_27, %65, %c0_28] : memref<6x16x128xf32, #tpu.memory_space<vmem>>, vector<1x16x128xf32>
    %67 = vector.shape_cast %66 : vector<1x16x128xf32> to vector<16x128xf32>
    %68 = vector.shape_cast %64 : vector<16x128xf32> to vector<1x16x128xf32>
    tpu.vector_store %arg4[%c0_27, %65, %c0_28], %68 {strides = array<i32>} : memref<6x16x128xf32, #tpu.memory_space<vmem>>, vector<1x16x128xf32>,
    %c0_29 = arith.constant 0 : index
    %69 = arith.index_cast %1 : i32 to index
    %c0_30 = arith.constant 0 : index
    %70 = vector.load %arg1[%c0_29, %69, %c0_30] : memref<8x16x128xf32, #tpu.memory_space<vmem>>, vector<1x16x128xf32>
    %71 = vector.shape_cast %70 : vector<1x16x128xf32> to vector<16x128xf32>
    %c0_31 = arith.constant 0 : index
    %c1_32 = arith.constant 1 : index
    %72 = memref.load %arg2[%c0_31, %c1_32] : memref<8x6xf32, #tpu.memory_space<smem>>
    %73 = vector.broadcast %72 : f32 to vector<16x128xf32>
    %74 = arith.mulf %71, %73 : vector<16x128xf32>
    %c0_33 = arith.constant 0 : index
    %c1_34 = arith.constant 1 : index
    %75 = memref.load %arg3[%c0_33, %c1_34] : memref<1x6xf32, #tpu.memory_space<smem>>
    %76 = vector.broadcast %75 : f32 to vector<16x128xf32>
    %77 = arith.addf %74, %76 : vector<16x128xf32>
    %c1_35 = arith.constant 1 : index
    %78 = arith.index_cast %1 : i32 to index
    %c0_36 = arith.constant 0 : index
    %79 = vector.load %arg1[%c1_35, %78, %c0_36] : memref<8x16x128xf32, #tpu.memory_space<vmem>>, vector<1x16x128xf32>
    %80 = vector.shape_cast %79 : vector<1x16x128xf32> to vector<16x128xf32>
    %c1_37 = arith.constant 1 : index
    %c1_38 = arith.constant 1 : index
    %81 = memref.load %arg2[%c1_37, %c1_38] : memref<8x6xf32, #tpu.memory_space<smem>>
    %82 = vector.broadcast %81 : f32 to vector<16x128xf32>
    %83 = arith.mulf %80, %82 : vector<16x128xf32>
    %84 = arith.addf %77, %83 : vector<16x128xf32>
    %c2_39 = arith.constant 2 : index
    %85 = arith.index_cast %1 : i32 to index
    %c0_40 = arith.constant 0 : index
    %86 = vector.load %arg1[%c2_39, %85, %c0_40] : memref<8x16x128xf32, #tpu.memory_space<vmem>>, vector<1x16x128xf32>
    %87 = vector.shape_cast %86 : vector<1x16x128xf32> to vector<16x128xf32>
    %c2_41 = arith.constant 2 : index
    %c1_42 = arith.constant 1 : index
    %88 = memref.load %arg2[%c2_41, %c1_42] : memref<8x6xf32, #tpu.memory_space<smem>>
    %89 = vector.broadcast %88 : f32 to vector<16x128xf32>
    %90 = arith.mulf %87, %89 : vector<16x128xf32>
    %91 = arith.addf %84, %90 : vector<16x128xf32>
    %c3_43 = arith.constant 3 : index
    %92 = arith.index_cast %1 : i32 to index
    %c0_44 = arith.constant 0 : index
    %93 = vector.load %arg1[%c3_43, %92, %c0_44] : memref<8x16x128xf32, #tpu.memory_space<vmem>>, vector<1x16x128xf32>
    %94 = vector.shape_cast %93 : vector<1x16x128xf32> to vector<16x128xf32>
    %c3_45 = arith.constant 3 : index
    %c1_46 = arith.constant 1 : index
    %95 = memref.load %arg2[%c3_45, %c1_46] : memref<8x6xf32, #tpu.memory_space<smem>>
    %96 = vector.broadcast %95 : f32 to vector<16x128xf32>
    %97 = arith.mulf %94, %96 : vector<16x128xf32>
    %98 = arith.addf %91, %97 : vector<16x128xf32>
    %c4_47 = arith.constant 4 : index
    %99 = arith.index_cast %1 : i32 to index
    %c0_48 = arith.constant 0 : index
    %100 = vector.load %arg1[%c4_47, %99, %c0_48] : memref<8x16x128xf32, #tpu.memory_space<vmem>>, vector<1x16x128xf32>
    %101 = vector.shape_cast %100 : vector<1x16x128xf32> to vector<16x128xf32>
    %c4_49 = arith.constant 4 : index
    %c1_50 = arith.constant 1 : index
    %102 = memref.load %arg2[%c4_49, %c1_50] : memref<8x6xf32, #tpu.memory_space<smem>>
    %103 = vector.broadcast %102 : f32 to vector<16x128xf32>
    %104 = arith.mulf %101, %103 : vector<16x128xf32>
    %105 = arith.addf %98, %104 : vector<16x128xf32>
    %c5_51 = arith.constant 5 : index
    %106 = arith.index_cast %1 : i32 to index
    %c0_52 = arith.constant 0 : index
    %107 = vector.load %arg1[%c5_51, %106, %c0_52] : memref<8x16x128xf32, #tpu.memory_space<vmem>>, vector<1x16x128xf32>
    %108 = vector.shape_cast %107 : vector<1x16x128xf32> to vector<16x128xf32>
    %c5_53 = arith.constant 5 : index
    %c1_54 = arith.constant 1 : index
    %109 = memref.load %arg2[%c5_53, %c1_54] : memref<8x6xf32, #tpu.memory_space<smem>>
    %110 = vector.broadcast %109 : f32 to vector<16x128xf32>
    %111 = arith.mulf %108, %110 : vector<16x128xf32>
    %112 = arith.addf %105, %111 : vector<16x128xf32>
    %c6_55 = arith.constant 6 : index
    %113 = arith.index_cast %1 : i32 to index
    %c0_56 = arith.constant 0 : index
    %114 = vector.load %arg1[%c6_55, %113, %c0_56] : memref<8x16x128xf32, #tpu.memory_space<vmem>>, vector<1x16x128xf32>
    %115 = vector.shape_cast %114 : vector<1x16x128xf32> to vector<16x128xf32>
    %c6_57 = arith.constant 6 : index
    %c1_58 = arith.constant 1 : index
    %116 = memref.load %arg2[%c6_57, %c1_58] : memref<8x6xf32, #tpu.memory_space<smem>>
    %117 = vector.broadcast %116 : f32 to vector<16x128xf32>
    %118 = arith.mulf %115, %117 : vector<16x128xf32>
    %119 = arith.addf %112, %118 : vector<16x128xf32>
    %c7_59 = arith.constant 7 : index
    %120 = arith.index_cast %1 : i32 to index
    %c0_60 = arith.constant 0 : index
    %121 = vector.load %arg1[%c7_59, %120, %c0_60] : memref<8x16x128xf32, #tpu.memory_space<vmem>>, vector<1x16x128xf32>
    %122 = vector.shape_cast %121 : vector<1x16x128xf32> to vector<16x128xf32>
    %c7_61 = arith.constant 7 : index
    %c1_62 = arith.constant 1 : index
    %123 = memref.load %arg2[%c7_61, %c1_62] : memref<8x6xf32, #tpu.memory_space<smem>>
    %124 = vector.broadcast %123 : f32 to vector<16x128xf32>
    %125 = arith.mulf %122, %124 : vector<16x128xf32>
    %126 = arith.addf %119, %125 : vector<16x128xf32>
    %cst_63 = arith.constant 0.000000e+00 : f32
    %127 = vector.broadcast %cst_63 : f32 to vector<16x128xf32>
    %128 = arith.cmpf ogt, %126, %127 : vector<16x128xf32>
    %cst_64 = arith.constant 0.00999999977 : f32
    %129 = vector.broadcast %cst_64 : f32 to vector<16x128xf32>
    %130 = arith.mulf %126, %129 : vector<16x128xf32>
    %131 = arith.select %128, %126, %130 : vector<16x128xi1>, vector<16x128xf32>
    %c1_65 = arith.constant 1 : index
    %132 = arith.index_cast %1 : i32 to index
    %c0_66 = arith.constant 0 : index
    %133 = vector.load %arg4[%c1_65, %132, %c0_66] : memref<6x16x128xf32, #tpu.memory_space<vmem>>, vector<1x16x128xf32>
    %134 = vector.shape_cast %133 : vector<1x16x128xf32> to vector<16x128xf32>
    %135 = vector.shape_cast %131 : vector<16x128xf32> to vector<1x16x128xf32>
    tpu.vector_store %arg4[%c1_65, %132, %c0_66], %135 {strides = array<i32>} : memref<6x16x128xf32, #tpu.memory_space<vmem>>, vector<1x16x128xf32>,
    %c0_67 = arith.constant 0 : index
    %136 = arith.index_cast %1 : i32 to index
    %c0_68 = arith.constant 0 : index
    %137 = vector.load %arg1[%c0_67, %136, %c0_68] : memref<8x16x128xf32, #tpu.memory_space<vmem>>, vector<1x16x128xf32>
    %138 = vector.shape_cast %137 : vector<1x16x128xf32> to vector<16x128xf32>
    %c0_69 = arith.constant 0 : index
    %c2_70 = arith.constant 2 : index
    %139 = memref.load %arg2[%c0_69, %c2_70] : memref<8x6xf32, #tpu.memory_space<smem>>
    %140 = vector.broadcast %139 : f32 to vector<16x128xf32>
    %141 = arith.mulf %138, %140 : vector<16x128xf32>
    %c0_71 = arith.constant 0 : index
    %c2_72 = arith.constant 2 : index
    %142 = memref.load %arg3[%c0_71, %c2_72] : memref<1x6xf32, #tpu.memory_space<smem>>
    %143 = vector.broadcast %142 : f32 to vector<16x128xf32>
    %144 = arith.addf %141, %143 : vector<16x128xf32>
    %c1_73 = arith.constant 1 : index
    %145 = arith.index_cast %1 : i32 to index
    %c0_74 = arith.constant 0 : index
    %146 = vector.load %arg1[%c1_73, %145, %c0_74] : memref<8x16x128xf32, #tpu.memory_space<vmem>>, vector<1x16x128xf32>
    %147 = vector.shape_cast %146 : vector<1x16x128xf32> to vector<16x128xf32>
    %c1_75 = arith.constant 1 : index
    %c2_76 = arith.constant 2 : index
    %148 = memref.load %arg2[%c1_75, %c2_76] : memref<8x6xf32, #tpu.memory_space<smem>>
    %149 = vector.broadcast %148 : f32 to vector<16x128xf32>
    %150 = arith.mulf %147, %149 : vector<16x128xf32>
    %151 = arith.addf %144, %150 : vector<16x128xf32>
    %c2_77 = arith.constant 2 : index
    %152 = arith.index_cast %1 : i32 to index
    %c0_78 = arith.constant 0 : index
    %153 = vector.load %arg1[%c2_77, %152, %c0_78] : memref<8x16x128xf32, #tpu.memory_space<vmem>>, vector<1x16x128xf32>
    %154 = vector.shape_cast %153 : vector<1x16x128xf32> to vector<16x128xf32>
    %c2_79 = arith.constant 2 : index
    %c2_80 = arith.constant 2 : index
    %155 = memref.load %arg2[%c2_79, %c2_80] : memref<8x6xf32, #tpu.memory_space<smem>>
    %156 = vector.broadcast %155 : f32 to vector<16x128xf32>
    %157 = arith.mulf %154, %156 : vector<16x128xf32>
    %158 = arith.addf %151, %157 : vector<16x128xf32>
    %c3_81 = arith.constant 3 : index
    %159 = arith.index_cast %1 : i32 to index
    %c0_82 = arith.constant 0 : index
    %160 = vector.load %arg1[%c3_81, %159, %c0_82] : memref<8x16x128xf32, #tpu.memory_space<vmem>>, vector<1x16x128xf32>
    %161 = vector.shape_cast %160 : vector<1x16x128xf32> to vector<16x128xf32>
    %c3_83 = arith.constant 3 : index
    %c2_84 = arith.constant 2 : index
    %162 = memref.load %arg2[%c3_83, %c2_84] : memref<8x6xf32, #tpu.memory_space<smem>>
    %163 = vector.broadcast %162 : f32 to vector<16x128xf32>
    %164 = arith.mulf %161, %163 : vector<16x128xf32>
    %165 = arith.addf %158, %164 : vector<16x128xf32>
    %c4_85 = arith.constant 4 : index
    %166 = arith.index_cast %1 : i32 to index
    %c0_86 = arith.constant 0 : index
    %167 = vector.load %arg1[%c4_85, %166, %c0_86] : memref<8x16x128xf32, #tpu.memory_space<vmem>>, vector<1x16x128xf32>
    %168 = vector.shape_cast %167 : vector<1x16x128xf32> to vector<16x128xf32>
    %c4_87 = arith.constant 4 : index
    %c2_88 = arith.constant 2 : index
    %169 = memref.load %arg2[%c4_87, %c2_88] : memref<8x6xf32, #tpu.memory_space<smem>>
    %170 = vector.broadcast %169 : f32 to vector<16x128xf32>
    %171 = arith.mulf %168, %170 : vector<16x128xf32>
    %172 = arith.addf %165, %171 : vector<16x128xf32>
    %c5_89 = arith.constant 5 : index
    %173 = arith.index_cast %1 : i32 to index
    %c0_90 = arith.constant 0 : index
    %174 = vector.load %arg1[%c5_89, %173, %c0_90] : memref<8x16x128xf32, #tpu.memory_space<vmem>>, vector<1x16x128xf32>
    %175 = vector.shape_cast %174 : vector<1x16x128xf32> to vector<16x128xf32>
    %c5_91 = arith.constant 5 : index
    %c2_92 = arith.constant 2 : index
    %176 = memref.load %arg2[%c5_91, %c2_92] : memref<8x6xf32, #tpu.memory_space<smem>>
    %177 = vector.broadcast %176 : f32 to vector<16x128xf32>
    %178 = arith.mulf %175, %177 : vector<16x128xf32>
    %179 = arith.addf %172, %178 : vector<16x128xf32>
    %c6_93 = arith.constant 6 : index
    %180 = arith.index_cast %1 : i32 to index
    %c0_94 = arith.constant 0 : index
    %181 = vector.load %arg1[%c6_93, %180, %c0_94] : memref<8x16x128xf32, #tpu.memory_space<vmem>>, vector<1x16x128xf32>
    %182 = vector.shape_cast %181 : vector<1x16x128xf32> to vector<16x128xf32>
    %c6_95 = arith.constant 6 : index
    %c2_96 = arith.constant 2 : index
    %183 = memref.load %arg2[%c6_95, %c2_96] : memref<8x6xf32, #tpu.memory_space<smem>>
    %184 = vector.broadcast %183 : f32 to vector<16x128xf32>
    %185 = arith.mulf %182, %184 : vector<16x128xf32>
    %186 = arith.addf %179, %185 : vector<16x128xf32>
    %c7_97 = arith.constant 7 : index
    %187 = arith.index_cast %1 : i32 to index
    %c0_98 = arith.constant 0 : index
    %188 = vector.load %arg1[%c7_97, %187, %c0_98] : memref<8x16x128xf32, #tpu.memory_space<vmem>>, vector<1x16x128xf32>
    %189 = vector.shape_cast %188 : vector<1x16x128xf32> to vector<16x128xf32>
    %c7_99 = arith.constant 7 : index
    %c2_100 = arith.constant 2 : index
    %190 = memref.load %arg2[%c7_99, %c2_100] : memref<8x6xf32, #tpu.memory_space<smem>>
    %191 = vector.broadcast %190 : f32 to vector<16x128xf32>
    %192 = arith.mulf %189, %191 : vector<16x128xf32>
    %193 = arith.addf %186, %192 : vector<16x128xf32>
    %cst_101 = arith.constant 0.000000e+00 : f32
    %194 = vector.broadcast %cst_101 : f32 to vector<16x128xf32>
    %195 = arith.cmpf ogt, %193, %194 : vector<16x128xf32>
    %cst_102 = arith.constant 0.00999999977 : f32
    %196 = vector.broadcast %cst_102 : f32 to vector<16x128xf32>
    %197 = arith.mulf %193, %196 : vector<16x128xf32>
    %198 = arith.select %195, %193, %197 : vector<16x128xi1>, vector<16x128xf32>
    %c2_103 = arith.constant 2 : index
    %199 = arith.index_cast %1 : i32 to index
    %c0_104 = arith.constant 0 : index
    %200 = vector.load %arg4[%c2_103, %199, %c0_104] : memref<6x16x128xf32, #tpu.memory_space<vmem>>, vector<1x16x128xf32>
    %201 = vector.shape_cast %200 : vector<1x16x128xf32> to vector<16x128xf32>
    %202 = vector.shape_cast %198 : vector<16x128xf32> to vector<1x16x128xf32>
    tpu.vector_store %arg4[%c2_103, %199, %c0_104], %202 {strides = array<i32>} : memref<6x16x128xf32, #tpu.memory_space<vmem>>, vector<1x16x128xf32>,
    %c0_105 = arith.constant 0 : index
    %203 = arith.index_cast %1 : i32 to index
    %c0_106 = arith.constant 0 : index
    %204 = vector.load %arg1[%c0_105, %203, %c0_106] : memref<8x16x128xf32, #tpu.memory_space<vmem>>, vector<1x16x128xf32>
    %205 = vector.shape_cast %204 : vector<1x16x128xf32> to vector<16x128xf32>
    %c0_107 = arith.constant 0 : index
    %c3_108 = arith.constant 3 : index
    %206 = memref.load %arg2[%c0_107, %c3_108] : memref<8x6xf32, #tpu.memory_space<smem>>
    %207 = vector.broadcast %206 : f32 to vector<16x128xf32>
    %208 = arith.mulf %205, %207 : vector<16x128xf32>
    %c0_109 = arith.constant 0 : index
    %c3_110 = arith.constant 3 : index
    %209 = memref.load %arg3[%c0_109, %c3_110] : memref<1x6xf32, #tpu.memory_space<smem>>
    %210 = vector.broadcast %209 : f32 to vector<16x128xf32>
    %211 = arith.addf %208, %210 : vector<16x128xf32>
    %c1_111 = arith.constant 1 : index
    %212 = arith.index_cast %1 : i32 to index
    %c0_112 = arith.constant 0 : index
    %213 = vector.load %arg1[%c1_111, %212, %c0_112] : memref<8x16x128xf32, #tpu.memory_space<vmem>>, vector<1x16x128xf32>
    %214 = vector.shape_cast %213 : vector<1x16x128xf32> to vector<16x128xf32>
    %c1_113 = arith.constant 1 : index
    %c3_114 = arith.constant 3 : index
    %215 = memref.load %arg2[%c1_113, %c3_114] : memref<8x6xf32, #tpu.memory_space<smem>>
    %216 = vector.broadcast %215 : f32 to vector<16x128xf32>
    %217 = arith.mulf %214, %216 : vector<16x128xf32>
    %218 = arith.addf %211, %217 : vector<16x128xf32>
    %c2_115 = arith.constant 2 : index
    %219 = arith.index_cast %1 : i32 to index
    %c0_116 = arith.constant 0 : index
    %220 = vector.load %arg1[%c2_115, %219, %c0_116] : memref<8x16x128xf32, #tpu.memory_space<vmem>>, vector<1x16x128xf32>
    %221 = vector.shape_cast %220 : vector<1x16x128xf32> to vector<16x128xf32>
    %c2_117 = arith.constant 2 : index
    %c3_118 = arith.constant 3 : index
    %222 = memref.load %arg2[%c2_117, %c3_118] : memref<8x6xf32, #tpu.memory_space<smem>>
    %223 = vector.broadcast %222 : f32 to vector<16x128xf32>
    %224 = arith.mulf %221, %223 : vector<16x128xf32>
    %225 = arith.addf %218, %224 : vector<16x128xf32>
    %c3_119 = arith.constant 3 : index
    %226 = arith.index_cast %1 : i32 to index
    %c0_120 = arith.constant 0 : index
    %227 = vector.load %arg1[%c3_119, %226, %c0_120] : memref<8x16x128xf32, #tpu.memory_space<vmem>>, vector<1x16x128xf32>
    %228 = vector.shape_cast %227 : vector<1x16x128xf32> to vector<16x128xf32>
    %c3_121 = arith.constant 3 : index
    %c3_122 = arith.constant 3 : index
    %229 = memref.load %arg2[%c3_121, %c3_122] : memref<8x6xf32, #tpu.memory_space<smem>>
    %230 = vector.broadcast %229 : f32 to vector<16x128xf32>
    %231 = arith.mulf %228, %230 : vector<16x128xf32>
    %232 = arith.addf %225, %231 : vector<16x128xf32>
    %c4_123 = arith.constant 4 : index
    %233 = arith.index_cast %1 : i32 to index
    %c0_124 = arith.constant 0 : index
    %234 = vector.load %arg1[%c4_123, %233, %c0_124] : memref<8x16x128xf32, #tpu.memory_space<vmem>>, vector<1x16x128xf32>
    %235 = vector.shape_cast %234 : vector<1x16x128xf32> to vector<16x128xf32>
    %c4_125 = arith.constant 4 : index
    %c3_126 = arith.constant 3 : index
    %236 = memref.load %arg2[%c4_125, %c3_126] : memref<8x6xf32, #tpu.memory_space<smem>>
    %237 = vector.broadcast %236 : f32 to vector<16x128xf32>
    %238 = arith.mulf %235, %237 : vector<16x128xf32>
    %239 = arith.addf %232, %238 : vector<16x128xf32>
    %c5_127 = arith.constant 5 : index
    %240 = arith.index_cast %1 : i32 to index
    %c0_128 = arith.constant 0 : index
    %241 = vector.load %arg1[%c5_127, %240, %c0_128] : memref<8x16x128xf32, #tpu.memory_space<vmem>>, vector<1x16x128xf32>
    %242 = vector.shape_cast %241 : vector<1x16x128xf32> to vector<16x128xf32>
    %c5_129 = arith.constant 5 : index
    %c3_130 = arith.constant 3 : index
    %243 = memref.load %arg2[%c5_129, %c3_130] : memref<8x6xf32, #tpu.memory_space<smem>>
    %244 = vector.broadcast %243 : f32 to vector<16x128xf32>
    %245 = arith.mulf %242, %244 : vector<16x128xf32>
    %246 = arith.addf %239, %245 : vector<16x128xf32>
    %c6_131 = arith.constant 6 : index
    %247 = arith.index_cast %1 : i32 to index
    %c0_132 = arith.constant 0 : index
    %248 = vector.load %arg1[%c6_131, %247, %c0_132] : memref<8x16x128xf32, #tpu.memory_space<vmem>>, vector<1x16x128xf32>
    %249 = vector.shape_cast %248 : vector<1x16x128xf32> to vector<16x128xf32>
    %c6_133 = arith.constant 6 : index
    %c3_134 = arith.constant 3 : index
    %250 = memref.load %arg2[%c6_133, %c3_134] : memref<8x6xf32, #tpu.memory_space<smem>>
    %251 = vector.broadcast %250 : f32 to vector<16x128xf32>
    %252 = arith.mulf %249, %251 : vector<16x128xf32>
    %253 = arith.addf %246, %252 : vector<16x128xf32>
    %c7_135 = arith.constant 7 : index
    %254 = arith.index_cast %1 : i32 to index
    %c0_136 = arith.constant 0 : index
    %255 = vector.load %arg1[%c7_135, %254, %c0_136] : memref<8x16x128xf32, #tpu.memory_space<vmem>>, vector<1x16x128xf32>
    %256 = vector.shape_cast %255 : vector<1x16x128xf32> to vector<16x128xf32>
    %c7_137 = arith.constant 7 : index
    %c3_138 = arith.constant 3 : index
    %257 = memref.load %arg2[%c7_137, %c3_138] : memref<8x6xf32, #tpu.memory_space<smem>>
    %258 = vector.broadcast %257 : f32 to vector<16x128xf32>
    %259 = arith.mulf %256, %258 : vector<16x128xf32>
    %260 = arith.addf %253, %259 : vector<16x128xf32>
    %cst_139 = arith.constant 0.000000e+00 : f32
    %261 = vector.broadcast %cst_139 : f32 to vector<16x128xf32>
    %262 = arith.cmpf ogt, %260, %261 : vector<16x128xf32>
    %cst_140 = arith.constant 0.00999999977 : f32
    %263 = vector.broadcast %cst_140 : f32 to vector<16x128xf32>
    %264 = arith.mulf %260, %263 : vector<16x128xf32>
    %265 = arith.select %262, %260, %264 : vector<16x128xi1>, vector<16x128xf32>
    %c3_141 = arith.constant 3 : index
    %266 = arith.index_cast %1 : i32 to index
    %c0_142 = arith.constant 0 : index
    %267 = vector.load %arg4[%c3_141, %266, %c0_142] : memref<6x16x128xf32, #tpu.memory_space<vmem>>, vector<1x16x128xf32>
    %268 = vector.shape_cast %267 : vector<1x16x128xf32> to vector<16x128xf32>
    %269 = vector.shape_cast %265 : vector<16x128xf32> to vector<1x16x128xf32>
    tpu.vector_store %arg4[%c3_141, %266, %c0_142], %269 {strides = array<i32>} : memref<6x16x128xf32, #tpu.memory_space<vmem>>, vector<1x16x128xf32>,
    %c0_143 = arith.constant 0 : index
    %270 = arith.index_cast %1 : i32 to index
    %c0_144 = arith.constant 0 : index
    %271 = vector.load %arg1[%c0_143, %270, %c0_144] : memref<8x16x128xf32, #tpu.memory_space<vmem>>, vector<1x16x128xf32>
    %272 = vector.shape_cast %271 : vector<1x16x128xf32> to vector<16x128xf32>
    %c0_145 = arith.constant 0 : index
    %c4_146 = arith.constant 4 : index
    %273 = memref.load %arg2[%c0_145, %c4_146] : memref<8x6xf32, #tpu.memory_space<smem>>
    %274 = vector.broadcast %273 : f32 to vector<16x128xf32>
    %275 = arith.mulf %272, %274 : vector<16x128xf32>
    %c0_147 = arith.constant 0 : index
    %c4_148 = arith.constant 4 : index
    %276 = memref.load %arg3[%c0_147, %c4_148] : memref<1x6xf32, #tpu.memory_space<smem>>
    %277 = vector.broadcast %276 : f32 to vector<16x128xf32>
    %278 = arith.addf %275, %277 : vector<16x128xf32>
    %c1_149 = arith.constant 1 : index
    %279 = arith.index_cast %1 : i32 to index
    %c0_150 = arith.constant 0 : index
    %280 = vector.load %arg1[%c1_149, %279, %c0_150] : memref<8x16x128xf32, #tpu.memory_space<vmem>>, vector<1x16x128xf32>
    %281 = vector.shape_cast %280 : vector<1x16x128xf32> to vector<16x128xf32>
    %c1_151 = arith.constant 1 : index
    %c4_152 = arith.constant 4 : index
    %282 = memref.load %arg2[%c1_151, %c4_152] : memref<8x6xf32, #tpu.memory_space<smem>>
    %283 = vector.broadcast %282 : f32 to vector<16x128xf32>
    %284 = arith.mulf %281, %283 : vector<16x128xf32>
    %285 = arith.addf %278, %284 : vector<16x128xf32>
    %c2_153 = arith.constant 2 : index
    %286 = arith.index_cast %1 : i32 to index
    %c0_154 = arith.constant 0 : index
    %287 = vector.load %arg1[%c2_153, %286, %c0_154] : memref<8x16x128xf32, #tpu.memory_space<vmem>>, vector<1x16x128xf32>
    %288 = vector.shape_cast %287 : vector<1x16x128xf32> to vector<16x128xf32>
    %c2_155 = arith.constant 2 : index
    %c4_156 = arith.constant 4 : index
    %289 = memref.load %arg2[%c2_155, %c4_156] : memref<8x6xf32, #tpu.memory_space<smem>>
    %290 = vector.broadcast %289 : f32 to vector<16x128xf32>
    %291 = arith.mulf %288, %290 : vector<16x128xf32>
    %292 = arith.addf %285, %291 : vector<16x128xf32>
    %c3_157 = arith.constant 3 : index
    %293 = arith.index_cast %1 : i32 to index
    %c0_158 = arith.constant 0 : index
    %294 = vector.load %arg1[%c3_157, %293, %c0_158] : memref<8x16x128xf32, #tpu.memory_space<vmem>>, vector<1x16x128xf32>
    %295 = vector.shape_cast %294 : vector<1x16x128xf32> to vector<16x128xf32>
    %c3_159 = arith.constant 3 : index
    %c4_160 = arith.constant 4 : index
    %296 = memref.load %arg2[%c3_159, %c4_160] : memref<8x6xf32, #tpu.memory_space<smem>>
    %297 = vector.broadcast %296 : f32 to vector<16x128xf32>
    %298 = arith.mulf %295, %297 : vector<16x128xf32>
    %299 = arith.addf %292, %298 : vector<16x128xf32>
    %c4_161 = arith.constant 4 : index
    %300 = arith.index_cast %1 : i32 to index
    %c0_162 = arith.constant 0 : index
    %301 = vector.load %arg1[%c4_161, %300, %c0_162] : memref<8x16x128xf32, #tpu.memory_space<vmem>>, vector<1x16x128xf32>
    %302 = vector.shape_cast %301 : vector<1x16x128xf32> to vector<16x128xf32>
    %c4_163 = arith.constant 4 : index
    %c4_164 = arith.constant 4 : index
    %303 = memref.load %arg2[%c4_163, %c4_164] : memref<8x6xf32, #tpu.memory_space<smem>>
    %304 = vector.broadcast %303 : f32 to vector<16x128xf32>
    %305 = arith.mulf %302, %304 : vector<16x128xf32>
    %306 = arith.addf %299, %305 : vector<16x128xf32>
    %c5_165 = arith.constant 5 : index
    %307 = arith.index_cast %1 : i32 to index
    %c0_166 = arith.constant 0 : index
    %308 = vector.load %arg1[%c5_165, %307, %c0_166] : memref<8x16x128xf32, #tpu.memory_space<vmem>>, vector<1x16x128xf32>
    %309 = vector.shape_cast %308 : vector<1x16x128xf32> to vector<16x128xf32>
    %c5_167 = arith.constant 5 : index
    %c4_168 = arith.constant 4 : index
    %310 = memref.load %arg2[%c5_167, %c4_168] : memref<8x6xf32, #tpu.memory_space<smem>>
    %311 = vector.broadcast %310 : f32 to vector<16x128xf32>
    %312 = arith.mulf %309, %311 : vector<16x128xf32>
    %313 = arith.addf %306, %312 : vector<16x128xf32>
    %c6_169 = arith.constant 6 : index
    %314 = arith.index_cast %1 : i32 to index
    %c0_170 = arith.constant 0 : index
    %315 = vector.load %arg1[%c6_169, %314, %c0_170] : memref<8x16x128xf32, #tpu.memory_space<vmem>>, vector<1x16x128xf32>
    %316 = vector.shape_cast %315 : vector<1x16x128xf32> to vector<16x128xf32>
    %c6_171 = arith.constant 6 : index
    %c4_172 = arith.constant 4 : index
    %317 = memref.load %arg2[%c6_171, %c4_172] : memref<8x6xf32, #tpu.memory_space<smem>>
    %318 = vector.broadcast %317 : f32 to vector<16x128xf32>
    %319 = arith.mulf %316, %318 : vector<16x128xf32>
    %320 = arith.addf %313, %319 : vector<16x128xf32>
    %c7_173 = arith.constant 7 : index
    %321 = arith.index_cast %1 : i32 to index
    %c0_174 = arith.constant 0 : index
    %322 = vector.load %arg1[%c7_173, %321, %c0_174] : memref<8x16x128xf32, #tpu.memory_space<vmem>>, vector<1x16x128xf32>
    %323 = vector.shape_cast %322 : vector<1x16x128xf32> to vector<16x128xf32>
    %c7_175 = arith.constant 7 : index
    %c4_176 = arith.constant 4 : index
    %324 = memref.load %arg2[%c7_175, %c4_176] : memref<8x6xf32, #tpu.memory_space<smem>>
    %325 = vector.broadcast %324 : f32 to vector<16x128xf32>
    %326 = arith.mulf %323, %325 : vector<16x128xf32>
    %327 = arith.addf %320, %326 : vector<16x128xf32>
    %cst_177 = arith.constant 0.000000e+00 : f32
    %328 = vector.broadcast %cst_177 : f32 to vector<16x128xf32>
    %329 = arith.cmpf ogt, %327, %328 : vector<16x128xf32>
    %cst_178 = arith.constant 0.00999999977 : f32
    %330 = vector.broadcast %cst_178 : f32 to vector<16x128xf32>
    %331 = arith.mulf %327, %330 : vector<16x128xf32>
    %332 = arith.select %329, %327, %331 : vector<16x128xi1>, vector<16x128xf32>
    %c4_179 = arith.constant 4 : index
    %333 = arith.index_cast %1 : i32 to index
    %c0_180 = arith.constant 0 : index
    %334 = vector.load %arg4[%c4_179, %333, %c0_180] : memref<6x16x128xf32, #tpu.memory_space<vmem>>, vector<1x16x128xf32>
    %335 = vector.shape_cast %334 : vector<1x16x128xf32> to vector<16x128xf32>
    %336 = vector.shape_cast %332 : vector<16x128xf32> to vector<1x16x128xf32>
    tpu.vector_store %arg4[%c4_179, %333, %c0_180], %336 {strides = array<i32>} : memref<6x16x128xf32, #tpu.memory_space<vmem>>, vector<1x16x128xf32>,
    %c0_181 = arith.constant 0 : index
    %337 = arith.index_cast %1 : i32 to index
    %c0_182 = arith.constant 0 : index
    %338 = vector.load %arg1[%c0_181, %337, %c0_182] : memref<8x16x128xf32, #tpu.memory_space<vmem>>, vector<1x16x128xf32>
    %339 = vector.shape_cast %338 : vector<1x16x128xf32> to vector<16x128xf32>
    %c0_183 = arith.constant 0 : index
    %c5_184 = arith.constant 5 : index
    %340 = memref.load %arg2[%c0_183, %c5_184] : memref<8x6xf32, #tpu.memory_space<smem>>
    %341 = vector.broadcast %340 : f32 to vector<16x128xf32>
    %342 = arith.mulf %339, %341 : vector<16x128xf32>
    %c0_185 = arith.constant 0 : index
    %c5_186 = arith.constant 5 : index
    %343 = memref.load %arg3[%c0_185, %c5_186] : memref<1x6xf32, #tpu.memory_space<smem>>
    %344 = vector.broadcast %343 : f32 to vector<16x128xf32>
    %345 = arith.addf %342, %344 : vector<16x128xf32>
    %c1_187 = arith.constant 1 : index
    %346 = arith.index_cast %1 : i32 to index
    %c0_188 = arith.constant 0 : index
    %347 = vector.load %arg1[%c1_187, %346, %c0_188] : memref<8x16x128xf32, #tpu.memory_space<vmem>>, vector<1x16x128xf32>
    %348 = vector.shape_cast %347 : vector<1x16x128xf32> to vector<16x128xf32>
    %c1_189 = arith.constant 1 : index
    %c5_190 = arith.constant 5 : index
    %349 = memref.load %arg2[%c1_189, %c5_190] : memref<8x6xf32, #tpu.memory_space<smem>>
    %350 = vector.broadcast %349 : f32 to vector<16x128xf32>
    %351 = arith.mulf %348, %350 : vector<16x128xf32>
    %352 = arith.addf %345, %351 : vector<16x128xf32>
    %c2_191 = arith.constant 2 : index
    %353 = arith.index_cast %1 : i32 to index
    %c0_192 = arith.constant 0 : index
    %354 = vector.load %arg1[%c2_191, %353, %c0_192] : memref<8x16x128xf32, #tpu.memory_space<vmem>>, vector<1x16x128xf32>
    %355 = vector.shape_cast %354 : vector<1x16x128xf32> to vector<16x128xf32>
    %c2_193 = arith.constant 2 : index
    %c5_194 = arith.constant 5 : index
    %356 = memref.load %arg2[%c2_193, %c5_194] : memref<8x6xf32, #tpu.memory_space<smem>>
    %357 = vector.broadcast %356 : f32 to vector<16x128xf32>
    %358 = arith.mulf %355, %357 : vector<16x128xf32>
    %359 = arith.addf %352, %358 : vector<16x128xf32>
    %c3_195 = arith.constant 3 : index
    %360 = arith.index_cast %1 : i32 to index
    %c0_196 = arith.constant 0 : index
    %361 = vector.load %arg1[%c3_195, %360, %c0_196] : memref<8x16x128xf32, #tpu.memory_space<vmem>>, vector<1x16x128xf32>
    %362 = vector.shape_cast %361 : vector<1x16x128xf32> to vector<16x128xf32>
    %c3_197 = arith.constant 3 : index
    %c5_198 = arith.constant 5 : index
    %363 = memref.load %arg2[%c3_197, %c5_198] : memref<8x6xf32, #tpu.memory_space<smem>>
    %364 = vector.broadcast %363 : f32 to vector<16x128xf32>
    %365 = arith.mulf %362, %364 : vector<16x128xf32>
    %366 = arith.addf %359, %365 : vector<16x128xf32>
    %c4_199 = arith.constant 4 : index
    %367 = arith.index_cast %1 : i32 to index
    %c0_200 = arith.constant 0 : index
    %368 = vector.load %arg1[%c4_199, %367, %c0_200] : memref<8x16x128xf32, #tpu.memory_space<vmem>>, vector<1x16x128xf32>
    %369 = vector.shape_cast %368 : vector<1x16x128xf32> to vector<16x128xf32>
    %c4_201 = arith.constant 4 : index
    %c5_202 = arith.constant 5 : index
    %370 = memref.load %arg2[%c4_201, %c5_202] : memref<8x6xf32, #tpu.memory_space<smem>>
    %371 = vector.broadcast %370 : f32 to vector<16x128xf32>
    %372 = arith.mulf %369, %371 : vector<16x128xf32>
    %373 = arith.addf %366, %372 : vector<16x128xf32>
    %c5_203 = arith.constant 5 : index
    %374 = arith.index_cast %1 : i32 to index
    %c0_204 = arith.constant 0 : index
    %375 = vector.load %arg1[%c5_203, %374, %c0_204] : memref<8x16x128xf32, #tpu.memory_space<vmem>>, vector<1x16x128xf32>
    %376 = vector.shape_cast %375 : vector<1x16x128xf32> to vector<16x128xf32>
    %c5_205 = arith.constant 5 : index
    %c5_206 = arith.constant 5 : index
    %377 = memref.load %arg2[%c5_205, %c5_206] : memref<8x6xf32, #tpu.memory_space<smem>>
    %378 = vector.broadcast %377 : f32 to vector<16x128xf32>
    %379 = arith.mulf %376, %378 : vector<16x128xf32>
    %380 = arith.addf %373, %379 : vector<16x128xf32>
    %c6_207 = arith.constant 6 : index
    %381 = arith.index_cast %1 : i32 to index
    %c0_208 = arith.constant 0 : index
    %382 = vector.load %arg1[%c6_207, %381, %c0_208] : memref<8x16x128xf32, #tpu.memory_space<vmem>>, vector<1x16x128xf32>
    %383 = vector.shape_cast %382 : vector<1x16x128xf32> to vector<16x128xf32>
    %c6_209 = arith.constant 6 : index
    %c5_210 = arith.constant 5 : index
    %384 = memref.load %arg2[%c6_209, %c5_210] : memref<8x6xf32, #tpu.memory_space<smem>>
    %385 = vector.broadcast %384 : f32 to vector<16x128xf32>
    %386 = arith.mulf %383, %385 : vector<16x128xf32>
    %387 = arith.addf %380, %386 : vector<16x128xf32>
    %c7_211 = arith.constant 7 : index
    %388 = arith.index_cast %1 : i32 to index
    %c0_212 = arith.constant 0 : index
    %389 = vector.load %arg1[%c7_211, %388, %c0_212] : memref<8x16x128xf32, #tpu.memory_space<vmem>>, vector<1x16x128xf32>
    %390 = vector.shape_cast %389 : vector<1x16x128xf32> to vector<16x128xf32>
    %c7_213 = arith.constant 7 : index
    %c5_214 = arith.constant 5 : index
    %391 = memref.load %arg2[%c7_213, %c5_214] : memref<8x6xf32, #tpu.memory_space<smem>>
    %392 = vector.broadcast %391 : f32 to vector<16x128xf32>
    %393 = arith.mulf %390, %392 : vector<16x128xf32>
    %394 = arith.addf %387, %393 : vector<16x128xf32>
    %cst_215 = arith.constant 0.000000e+00 : f32
    %395 = vector.broadcast %cst_215 : f32 to vector<16x128xf32>
    %396 = arith.cmpf ogt, %394, %395 : vector<16x128xf32>
    %cst_216 = arith.constant 0.00999999977 : f32
    %397 = vector.broadcast %cst_216 : f32 to vector<16x128xf32>
    %398 = arith.mulf %394, %397 : vector<16x128xf32>
    %399 = arith.select %396, %394, %398 : vector<16x128xi1>, vector<16x128xf32>
    %c5_217 = arith.constant 5 : index
    %400 = arith.index_cast %1 : i32 to index
    %c0_218 = arith.constant 0 : index
    %401 = vector.load %arg4[%c5_217, %400, %c0_218] : memref<6x16x128xf32, #tpu.memory_space<vmem>>, vector<1x16x128xf32>
    %402 = vector.shape_cast %401 : vector<1x16x128xf32> to vector<16x128xf32>
    %403 = vector.shape_cast %399 : vector<16x128xf32> to vector<1x16x128xf32>
    tpu.vector_store %arg4[%c5_217, %400, %c0_218], %403 {strides = array<i32>} : memref<6x16x128xf32, #tpu.memory_space<vmem>>, vector<1x16x128xf32>,
    %c1_i32 = arith.constant 1 : i32
    return
  }
  func.func @transform_0(%arg0: i32) -> (i32, i32, i32) {
    %c0_i32 = arith.constant 0 : i32
    %c0_i32_0 = arith.constant 0 : i32
    %c0_i32_1 = arith.constant 0 : i32
    return %c0_i32, %arg0, %c0_i32_0 : i32, i32, i32
  }
  func.func @transform_1(%arg0: i32) -> (i32, i32) {
    %c0_i32 = arith.constant 0 : i32
    %c0_i32_0 = arith.constant 0 : i32
    %c0_i32_1 = arith.constant 0 : i32
    return %c0_i32, %c0_i32_0 : i32, i32
  }
  func.func @transform_2(%arg0: i32) -> (i32, i32) {
    %c0_i32 = arith.constant 0 : i32
    %c0_i32_0 = arith.constant 0 : i32
    %c0_i32_1 = arith.constant 0 : i32
    return %c0_i32, %c0_i32_0 : i32, i32
  }
  func.func @transform_3(%arg0: i32) -> (i32, i32, i32) {
    %c0_i32 = arith.constant 0 : i32
    %c0_i32_0 = arith.constant 0 : i32
    %c0_i32_1 = arith.constant 0 : i32
    return %c0_i32, %arg0, %c0_i32_0 : i32, i32, i32
  }
}

</mosaic_0001>

<llo_original>
// kernel: linear_leaky.1
$region0: #{linear_leaky.1}
  #allocation0 [shape = 'u32[]', space=smem, size = 0x4, offset = 0x4, fixed_abs, tag = 'smem constant byte address 0x4 - core index']
  #allocation1 [shape = 'u32[72,128]{1,0:T(1,128)}', space=vmem, size = 0x9000, scoped, tag = 'internal scratch']
  %s0 = inlined_call_operand.vmem [shape: f32[8,16,128], index: 0, kind: input, shape index: {}]
  %s1 = inlined_call_operand.vmem [shape: f32[8,6], index: 1, kind: input, shape index: {}]
  %s2 = inlined_call_operand.vmem [shape: f32[1,6], index: 2, kind: input, shape index: {}]
  %s3 = inlined_call_operand.vmem [shape: f32[6,16,128], index: 3, kind: output, shape index: {}]
  %s4 = sld [smem:[#allocation0]]
  $region30: #{linear_leaky.1} parent=0
    _
  %s6 = ssub.s32 1, %s4
  %s7 = scalar_select 0, %s6, %s4
  $region1: #{linear_leaky.1} parent=0
    #allocation2 [shape = 'u8[4096]{0}', space=smem, size = 0x1000, scoped, tag = 'input window, operand 1, single buffered']
    #allocation3 [shape = 's32[1]{0}', space=sflag, size = 0x4, scoped, tag = 'scoped memory for linear_leaky.1']
    #allocation4 [shape = 'u8[512]{0}', space=smem, size = 0x200, scoped, tag = 'input window, operand 2, single buffered']
    #allocation5 [shape = 's32[1]{0}', space=sflag, size = 0x4, scoped, tag = 'scoped memory for linear_leaky.1']
    %8 = vsyncpa [#allocation3], 0
    %9 = vsyncpa [#allocation5], 0
    // Predicated region
    $region2: #{linear_leaky.1} parent=1 // pred_check
      _
    $region3: #{linear_leaky.1} parent=1 // pred_check_branch
      %11 = sbr.rel (0) target = $region5
    $region4: #{linear_leaky.1} parent=1 // pred_region
      _
    $region5: #{linear_leaky.1} parent=1 // pred_fallthru
      _
    // Predicated region
    $region6: #{linear_leaky.1} parent=1 // pred_check
      _
    $region7: #{linear_leaky.1} parent=1 // pred_check_branch
      %13 = sbr.rel (0) target = $region9
    $region8: #{linear_leaky.1} parent=1 // pred_region
      %15 = vsyncadd [#allocation3], 0
      %s17 = sshll.u32 %s1, 4
      %s18 = int_to_ptr.vmem [resolvable:$true] %s17
      %20 = dma.vmem_to_smem %s18, 128, [#allocation2], [#allocation3]
    $region9: #{linear_leaky.1} parent=1 // pred_fallthru
      _
    // Predicated region
    $region10: #{linear_leaky.1} parent=1 // pred_check
      _
    $region11: #{linear_leaky.1} parent=1 // pred_check_branch
      %22 = sbr.rel (0) target = $region13
    $region12: #{linear_leaky.1} parent=1 // pred_region
      %24 = vsyncadd [#allocation5], 0
      %s26 = sshll.u32 %s2, 4
      %s27 = int_to_ptr.vmem [resolvable:$true] %s26
      %29 = dma.vmem_to_smem %s27, 16, [#allocation4], [#allocation5]
    $region13: #{linear_leaky.1} parent=1 // pred_fallthru
      _
    // Predicated region
    $region14: #{linear_leaky.1} parent=1 // pred_check
      _
    $region15: #{linear_leaky.1} parent=1 // pred_check_branch
      %31 = sbr.rel (0) target = $region17
    $region16: #{linear_leaky.1} parent=1 // pred_region
      %33 = dma.done [#allocation3], 128
    $region17: #{linear_leaky.1} parent=1 // pred_fallthru
      _
    // Predicated region
    $region18: #{linear_leaky.1} parent=1 // pred_check
      _
    $region19: #{linear_leaky.1} parent=1 // pred_check_branch
      %35 = sbr.rel (0) target = $region21
    $region20: #{linear_leaky.1} parent=1 // pred_region
      %37 = dma.done [#allocation5], 16
    $region21: #{linear_leaky.1} parent=1 // pred_fallthru
      _
    %38 = sfence
    %v39 = vld [vmem:[%s0] sm:$0xff]
    %v40 = vld [vmem:[%s0 + $0x8] sm:$0xff]
    %s41 = sld [smem:[#allocation2]]
    %v42 = vstv %s41
    %v43 = vmul.f32 %v39, %v42
    %v44 = vmul.f32 %v40, %v42
    %s45 = sld [smem:[#allocation4]]
    %v46 = vstv %s45
    %v47 = vadd.f32 %v43, %v46
    %v48 = vadd.f32 %v44, %v46
    %s49 = sadd.s32 0, 16
    %s50 = scalar_lea.vmem %s0, %s49
    %v51 = vld [vmem:[%s50] sm:$0xff]
    %v52 = vld [vmem:[%s50 + $0x8] sm:$0xff]
    %s53 = sld [smem:[#allocation2 + $0x80]]
    %v54 = vstv %s53
    %v55 = vmul.f32 %v51, %v54
    %v56 = vmul.f32 %v52, %v54
    %v57 = vadd.f32 %v47, %v55
    %v58 = vadd.f32 %v48, %v56
    %s59 = sadd.s32 0, 32
    %s60 = scalar_lea.vmem %s0, %s59
    %v61 = vld [vmem:[%s60] sm:$0xff]
    %v62 = vld [vmem:[%s60 + $0x8] sm:$0xff]
    %s63 = sld [smem:[#allocation2 + $0x100]]
    %v64 = vstv %s63
    %v65 = vmul.f32 %v61, %v64
    %v66 = vmul.f32 %v62, %v64
    %v67 = vadd.f32 %v57, %v65
    %v68 = vadd.f32 %v58, %v66
    %s69 = sadd.s32 0, 48
    %s70 = scalar_lea.vmem %s0, %s69
    %v71 = vld [vmem:[%s70] sm:$0xff]
    %v72 = vld [vmem:[%s70 + $0x8] sm:$0xff]
    %s73 = sld [smem:[#allocation2 + $0x180]]
    %v74 = vstv %s73
    %v75 = vmul.f32 %v71, %v74
    %v76 = vmul.f32 %v72, %v74
    %v77 = vadd.f32 %v67, %v75
    %v78 = vadd.f32 %v68, %v76
    %s79 = sadd.s32 0, 64
    %s80 = scalar_lea.vmem %s0, %s79
    %v81 = vld [vmem:[%s80] sm:$0xff]
    %v82 = vld [vmem:[%s80 + $0x8] sm:$0xff]
    %s83 = sld [smem:[#allocation2 + $0x200]]
    %v84 = vstv %s83
    %v85 = vmul.f32 %v81, %v84
    %v86 = vmul.f32 %v82, %v84
    %v87 = vadd.f32 %v77, %v85
    %v88 = vadd.f32 %v78, %v86
    %s89 = sadd.s32 0, 80
    %s90 = scalar_lea.vmem %s0, %s89
    %v91 = vld [vmem:[%s90] sm:$0xff]
    %v92 = vld [vmem:[%s90 + $0x8] sm:$0xff]
    %s93 = sld [smem:[#allocation2 + $0x280]]
    %v94 = vstv %s93
    %v95 = vmul.f32 %v91, %v94
    %v96 = vmul.f32 %v92, %v94
    %v97 = vadd.f32 %v87, %v95
    %v98 = vadd.f32 %v88, %v96
    %s99 = sadd.s32 0, 96
    %s100 = scalar_lea.vmem %s0, %s99
    %v101 = vld [vmem:[%s100] sm:$0xff]
    %v102 = vld [vmem:[%s100 + $0x8] sm:$0xff]
    %s103 = sld [smem:[#allocation2 + $0x300]]
    %v104 = vstv %s103
    %v105 = vmul.f32 %v101, %v104
    %v106 = vmul.f32 %v102, %v104
    %v107 = vadd.f32 %v97, %v105
    %v108 = vadd.f32 %v98, %v106
    %s109 = sadd.s32 0, 112
    %s110 = scalar_lea.vmem %s0, %s109
    %v111 = vld [vmem:[%s110] sm:$0xff]
    %v112 = vld [vmem:[%s110 + $0x8] sm:$0xff]
    %s113 = sld [smem:[#allocation2 + $0x380]]
    %v114 = vstv %s113
    %v115 = vmul.f32 %v111, %v114
    %v116 = vmul.f32 %v112, %v114
    %v117 = vadd.f32 %v107, %v115
    %v118 = vadd.f32 %v108, %v116
    %vm119 = vcmp.gt.f32.partialorder %v117, 0.0
    %vm120 = vcmp.gt.f32.partialorder %v118, 0.0
    %v121 = vmul.f32 %v117, 0.01
    %v122 = vmul.f32 %v118, 0.01
    %v123 = vsel %vm119, %v117, %v121
    %v124 = vsel %vm120, %v118, %v122
    %125 = vst [vmem:[%s3] sm:$0xff] %v123
    %126 = vst [vmem:[%s3 + $0x8] sm:$0xff] %v124
    %v127 = vld [vmem:[%s0] sm:$0xff]
    %v128 = vld [vmem:[%s0 + $0x8] sm:$0xff]
    %s129 = sld [smem:[#allocation2 + $0x1]]
    %v130 = vstv %s129
    %v131 = vmul.f32 %v127, %v130
    %v132 = vmul.f32 %v128, %v130
    %s133 = sld [smem:[#allocation4 + $0x1]]
    %v134 = vstv %s133
    %v135 = vadd.f32 %v131, %v134
    %v136 = vadd.f32 %v132, %v134
    %v137 = vld [vmem:[%s50] sm:$0xff]
    %v138 = vld [vmem:[%s50 + $0x8] sm:$0xff]
    %s139 = sld [smem:[#allocation2 + $0x81]]
    %v140 = vstv %s139
    %v141 = vmul.f32 %v137, %v140
    %v142 = vmul.f32 %v138, %v140
    %v143 = vadd.f32 %v135, %v141
    %v144 = vadd.f32 %v136, %v142
    %v145 = vld [vmem:[%s60] sm:$0xff]
    %v146 = vld [vmem:[%s60 + $0x8] sm:$0xff]
    %s147 = sld [smem:[#allocation2 + $0x101]]
    %v148 = vstv %s147
    %v149 = vmul.f32 %v145, %v148
    %v150 = vmul.f32 %v146, %v148
    %v151 = vadd.f32 %v143, %v149
    %v152 = vadd.f32 %v144, %v150
    %v153 = vld [vmem:[%s70] sm:$0xff]
    %v154 = vld [vmem:[%s70 + $0x8] sm:$0xff]
    %s155 = sld [smem:[#allocation2 + $0x181]]
    %v156 = vstv %s155
    %v157 = vmul.f32 %v153, %v156
    %v158 = vmul.f32 %v154, %v156
    %v159 = vadd.f32 %v151, %v157
    %v160 = vadd.f32 %v152, %v158
    %v161 = vld [vmem:[%s80] sm:$0xff]
    %v162 = vld [vmem:[%s80 + $0x8] sm:$0xff]
    %s163 = sld [smem:[#allocation2 + $0x201]]
    %v164 = vstv %s163
    %v165 = vmul.f32 %v161, %v164
    %v166 = vmul.f32 %v162, %v164
    %v167 = vadd.f32 %v159, %v165
    %v168 = vadd.f32 %v160, %v166
    %v169 = vld [vmem:[%s90] sm:$0xff]
    %v170 = vld [vmem:[%s90 + $0x8] sm:$0xff]
    %s171 = sld [smem:[#allocation2 + $0x281]]
    %v172 = vstv %s171
    %v173 = vmul.f32 %v169, %v172
    %v174 = vmul.f32 %v170, %v172
    %v175 = vadd.f32 %v167, %v173
    %v176 = vadd.f32 %v168, %v174
    %v177 = vld [vmem:[%s100] sm:$0xff]
    %v178 = vld [vmem:[%s100 + $0x8] sm:$0xff]
    %s179 = sld [smem:[#allocation2 + $0x301]]
    %v180 = vstv %s179
    %v181 = vmul.f32 %v177, %v180
    %v182 = vmul.f32 %v178, %v180
    %v183 = vadd.f32 %v175, %v181
    %v184 = vadd.f32 %v176, %v182
    %v185 = vld [vmem:[%s110] sm:$0xff]
    %v186 = vld [vmem:[%s110 + $0x8] sm:$0xff]
    %s187 = sld [smem:[#allocation2 + $0x381]]
    %v188 = vstv %s187
    %v189 = vmul.f32 %v185, %v188
    %v190 = vmul.f32 %v186, %v188
    %v191 = vadd.f32 %v183, %v189
    %v192 = vadd.f32 %v184, %v190
    %vm193 = vcmp.gt.f32.partialorder %v191, 0.0
    %vm194 = vcmp.gt.f32.partialorder %v192, 0.0
    %v195 = vmul.f32 %v191, 0.01
    %v196 = vmul.f32 %v192, 0.01
    %v197 = vsel %vm193, %v191, %v195
    %v198 = vsel %vm194, %v192, %v196
    %s199 = scalar_lea.vmem %s3, %s49
    %200 = vst [vmem:[%s199] sm:$0xff] %v197
    %201 = vst [vmem:[%s199 + $0x8] sm:$0xff] %v198
    %v202 = vld [vmem:[%s0] sm:$0xff]
    %v203 = vld [vmem:[%s0 + $0x8] sm:$0xff]
    %s204 = sld [smem:[#allocation2 + $0x2]]
    %v205 = vstv %s204
    %v206 = vmul.f32 %v202, %v205
    %v207 = vmul.f32 %v203, %v205
    %s208 = sld [smem:[#allocation4 + $0x2]]
    %v209 = vstv %s208
    %v210 = vadd.f32 %v206, %v209
    %v211 = vadd.f32 %v207, %v209
    %v212 = vld [vmem:[%s50] sm:$0xff]
    %v213 = vld [vmem:[%s50 + $0x8] sm:$0xff]
    %s214 = sld [smem:[#allocation2 + $0x82]]
    %v215 = vstv %s214
    %v216 = vmul.f32 %v212, %v215
    %v217 = vmul.f32 %v213, %v215
    %v218 = vadd.f32 %v210, %v216
    %v219 = vadd.f32 %v211, %v217
    %v220 = vld [vmem:[%s60] sm:$0xff]
    %v221 = vld [vmem:[%s60 + $0x8] sm:$0xff]
    %s222 = sld [smem:[#allocation2 + $0x102]]
    %v223 = vstv %s222
    %v224 = vmul.f32 %v220, %v223
    %v225 = vmul.f32 %v221, %v223
    %v226 = vadd.f32 %v218, %v224
    %v227 = vadd.f32 %v219, %v225
    %v228 = vld [vmem:[%s70] sm:$0xff]
    %v229 = vld [vmem:[%s70 + $0x8] sm:$0xff]
    %s230 = sld [smem:[#allocation2 + $0x182]]
    %v231 = vstv %s230
    %v232 = vmul.f32 %v228, %v231
    %v233 = vmul.f32 %v229, %v231
    %v234 = vadd.f32 %v226, %v232
    %v235 = vadd.f32 %v227, %v233
    %v236 = vld [vmem:[%s80] sm:$0xff]
    %v237 = vld [vmem:[%s80 + $0x8] sm:$0xff]
    %s238 = sld [smem:[#allocation2 + $0x202]]
    %v239 = vstv %s238
    %v240 = vmul.f32 %v236, %v239
    %v241 = vmul.f32 %v237, %v239
    %v242 = vadd.f32 %v234, %v240
    %v243 = vadd.f32 %v235, %v241
    %v244 = vld [vmem:[%s90] sm:$0xff]
    %v245 = vld [vmem:[%s90 + $0x8] sm:$0xff]
    %s246 = sld [smem:[#allocation2 + $0x282]]
    %v247 = vstv %s246
    %v248 = vmul.f32 %v244, %v247
    %v249 = vmul.f32 %v245, %v247
    %v250 = vadd.f32 %v242, %v248
    %v251 = vadd.f32 %v243, %v249
    %v252 = vld [vmem:[%s100] sm:$0xff]
    %v253 = vld [vmem:[%s100 + $0x8] sm:$0xff]
    %s254 = sld [smem:[#allocation2 + $0x302]]
    %v255 = vstv %s254
    %v256 = vmul.f32 %v252, %v255
    %v257 = vmul.f32 %v253, %v255
    %v258 = vadd.f32 %v250, %v256
    %v259 = vadd.f32 %v251, %v257
    %v260 = vld [vmem:[%s110] sm:$0xff]
    %v261 = vld [vmem:[%s110 + $0x8] sm:$0xff]
    %s262 = sld [smem:[#allocation2 + $0x382]]
    %v263 = vstv %s262
    %v264 = vmul.f32 %v260, %v263
    %v265 = vmul.f32 %v261, %v263
    %v266 = vadd.f32 %v258, %v264
    %v267 = vadd.f32 %v259, %v265
    %vm268 = vcmp.gt.f32.partialorder %v266, 0.0
    %vm269 = vcmp.gt.f32.partialorder %v267, 0.0
    %v270 = vmul.f32 %v266, 0.01
    %v271 = vmul.f32 %v267, 0.01
    %v272 = vsel %vm268, %v266, %v270
    %v273 = vsel %vm269, %v267, %v271
    %s274 = scalar_lea.vmem %s3, %s59
    %275 = vst [vmem:[%s274] sm:$0xff] %v272
    %276 = vst [vmem:[%s274 + $0x8] sm:$0xff] %v273
    %v277 = vld [vmem:[%s0] sm:$0xff]
    %v278 = vld [vmem:[%s0 + $0x8] sm:$0xff]
    %s279 = sld [smem:[#allocation2 + $0x3]]
    %v280 = vstv %s279
    %v281 = vmul.f32 %v277, %v280
    %v282 = vmul.f32 %v278, %v280
    %s283 = sld [smem:[#allocation4 + $0x3]]
    %v284 = vstv %s283
    %v285 = vadd.f32 %v281, %v284
    %v286 = vadd.f32 %v282, %v284
    %v287 = vld [vmem:[%s50] sm:$0xff]
    %v288 = vld [vmem:[%s50 + $0x8] sm:$0xff]
    %s289 = sld [smem:[#allocation2 + $0x83]]
    %v290 = vstv %s289
    %v291 = vmul.f32 %v287, %v290
    %v292 = vmul.f32 %v288, %v290
    %v293 = vadd.f32 %v285, %v291
    %v294 = vadd.f32 %v286, %v292
    %v295 = vld [vmem:[%s60] sm:$0xff]
    %v296 = vld [vmem:[%s60 + $0x8] sm:$0xff]
    %s297 = sld [smem:[#allocation2 + $0x103]]
    %v298 = vstv %s297
    %v299 = vmul.f32 %v295, %v298
    %v300 = vmul.f32 %v296, %v298
    %v301 = vadd.f32 %v293, %v299
    %v302 = vadd.f32 %v294, %v300
    %v303 = vld [vmem:[%s70] sm:$0xff]
    %v304 = vld [vmem:[%s70 + $0x8] sm:$0xff]
    %s305 = sld [smem:[#allocation2 + $0x183]]
    %v306 = vstv %s305
    %v307 = vmul.f32 %v303, %v306
    %v308 = vmul.f32 %v304, %v306
    %v309 = vadd.f32 %v301, %v307
    %v310 = vadd.f32 %v302, %v308
    %v311 = vld [vmem:[%s80] sm:$0xff]
    %v312 = vld [vmem:[%s80 + $0x8] sm:$0xff]
    %s313 = sld [smem:[#allocation2 + $0x203]]
    %v314 = vstv %s313
    %v315 = vmul.f32 %v311, %v314
    %v316 = vmul.f32 %v312, %v314
    %v317 = vadd.f32 %v309, %v315
    %v318 = vadd.f32 %v310, %v316
    %v319 = vld [vmem:[%s90] sm:$0xff]
    %v320 = vld [vmem:[%s90 + $0x8] sm:$0xff]
    %s321 = sld [smem:[#allocation2 + $0x283]]
    %v322 = vstv %s321
    %v323 = vmul.f32 %v319, %v322
    %v324 = vmul.f32 %v320, %v322
    %v325 = vadd.f32 %v317, %v323
    %v326 = vadd.f32 %v318, %v324
    %v327 = vld [vmem:[%s100] sm:$0xff]
    %v328 = vld [vmem:[%s100 + $0x8] sm:$0xff]
    %s329 = sld [smem:[#allocation2 + $0x303]]
    %v330 = vstv %s329
    %v331 = vmul.f32 %v327, %v330
    %v332 = vmul.f32 %v328, %v330
    %v333 = vadd.f32 %v325, %v331
    %v334 = vadd.f32 %v326, %v332
    %v335 = vld [vmem:[%s110] sm:$0xff]
    %v336 = vld [vmem:[%s110 + $0x8] sm:$0xff]
    %s337 = sld [smem:[#allocation2 + $0x383]]
    %v338 = vstv %s337
    %v339 = vmul.f32 %v335, %v338
    %v340 = vmul.f32 %v336, %v338
    %v341 = vadd.f32 %v333, %v339
    %v342 = vadd.f32 %v334, %v340
    %vm343 = vcmp.gt.f32.partialorder %v341, 0.0
    %vm344 = vcmp.gt.f32.partialorder %v342, 0.0
    %v345 = vmul.f32 %v341, 0.01
    %v346 = vmul.f32 %v342, 0.01
    %v347 = vsel %vm343, %v341, %v345
    %v348 = vsel %vm344, %v342, %v346
    %s349 = scalar_lea.vmem %s3, %s69
    %350 = vst [vmem:[%s349] sm:$0xff] %v347
    %351 = vst [vmem:[%s349 + $0x8] sm:$0xff] %v348
    %v352 = vld [vmem:[%s0] sm:$0xff]
    %v353 = vld [vmem:[%s0 + $0x8] sm:$0xff]
    %s354 = sld [smem:[#allocation2 + $0x4]]
    %v355 = vstv %s354
    %v356 = vmul.f32 %v352, %v355
    %v357 = vmul.f32 %v353, %v355
    %s358 = sld [smem:[#allocation4 + $0x4]]
    %v359 = vstv %s358
    %v360 = vadd.f32 %v356, %v359
    %v361 = vadd.f32 %v357, %v359
    %v362 = vld [vmem:[%s50] sm:$0xff]
    %v363 = vld [vmem:[%s50 + $0x8] sm:$0xff]
    %s364 = sld [smem:[#allocation2 + $0x84]]
    %v365 = vstv %s364
    %v366 = vmul.f32 %v362, %v365
    %v367 = vmul.f32 %v363, %v365
    %v368 = vadd.f32 %v360, %v366
    %v369 = vadd.f32 %v361, %v367
    %v370 = vld [vmem:[%s60] sm:$0xff]
    %v371 = vld [vmem:[%s60 + $0x8] sm:$0xff]
    %s372 = sld [smem:[#allocation2 + $0x104]]
    %v373 = vstv %s372
    %v374 = vmul.f32 %v370, %v373
    %v375 = vmul.f32 %v371, %v373
    %v376 = vadd.f32 %v368, %v374
    %v377 = vadd.f32 %v369, %v375
    %v378 = vld [vmem:[%s70] sm:$0xff]
    %v379 = vld [vmem:[%s70 + $0x8] sm:$0xff]
    %s380 = sld [smem:[#allocation2 + $0x184]]
    %v381 = vstv %s380
    %v382 = vmul.f32 %v378, %v381
    %v383 = vmul.f32 %v379, %v381
    %v384 = vadd.f32 %v376, %v382
    %v385 = vadd.f32 %v377, %v383
    %v386 = vld [vmem:[%s80] sm:$0xff]
    %v387 = vld [vmem:[%s80 + $0x8] sm:$0xff]
    %s388 = sld [smem:[#allocation2 + $0x204]]
    %v389 = vstv %s388
    %v390 = vmul.f32 %v386, %v389
    %v391 = vmul.f32 %v387, %v389
    %v392 = vadd.f32 %v384, %v390
    %v393 = vadd.f32 %v385, %v391
    %v394 = vld [vmem:[%s90] sm:$0xff]
    %v395 = vld [vmem:[%s90 + $0x8] sm:$0xff]
    %s396 = sld [smem:[#allocation2 + $0x284]]
    %v397 = vstv %s396
    %v398 = vmul.f32 %v394, %v397
    %v399 = vmul.f32 %v395, %v397
    %v400 = vadd.f32 %v392, %v398
    %v401 = vadd.f32 %v393, %v399
    %v402 = vld [vmem:[%s100] sm:$0xff]
    %v403 = vld [vmem:[%s100 + $0x8] sm:$0xff]
    %s404 = sld [smem:[#allocation2 + $0x304]]
    %v405 = vstv %s404
    %v406 = vmul.f32 %v402, %v405
    %v407 = vmul.f32 %v403, %v405
    %v408 = vadd.f32 %v400, %v406
    %v409 = vadd.f32 %v401, %v407
    %v410 = vld [vmem:[%s110] sm:$0xff]
    %v411 = vld [vmem:[%s110 + $0x8] sm:$0xff]
    %s412 = sld [smem:[#allocation2 + $0x384]]
    %v413 = vstv %s412
    %v414 = vmul.f32 %v410, %v413
    %v415 = vmul.f32 %v411, %v413
    %v416 = vadd.f32 %v408, %v414
    %v417 = vadd.f32 %v409, %v415
    %vm418 = vcmp.gt.f32.partialorder %v416, 0.0
    %vm419 = vcmp.gt.f32.partialorder %v417, 0.0
    %v420 = vmul.f32 %v416, 0.01
    %v421 = vmul.f32 %v417, 0.01
    %v422 = vsel %vm418, %v416, %v420
    %v423 = vsel %vm419, %v417, %v421
    %s424 = scalar_lea.vmem %s3, %s79
    %425 = vst [vmem:[%s424] sm:$0xff] %v422
    %426 = vst [vmem:[%s424 + $0x8] sm:$0xff] %v423
    %v427 = vld [vmem:[%s0] sm:$0xff]
    %v428 = vld [vmem:[%s0 + $0x8] sm:$0xff]
    %s429 = sld [smem:[#allocation2 + $0x5]]
    %v430 = vstv %s429
    %v431 = vmul.f32 %v427, %v430
    %v432 = vmul.f32 %v428, %v430
    %s433 = sld [smem:[#allocation4 + $0x5]]
    %v434 = vstv %s433
    %v435 = vadd.f32 %v431, %v434
    %v436 = vadd.f32 %v432, %v434
    %v437 = vld [vmem:[%s50] sm:$0xff]
    %v438 = vld [vmem:[%s50 + $0x8] sm:$0xff]
    %s439 = sld [smem:[#allocation2 + $0x85]]
    %v440 = vstv %s439
    %v441 = vmul.f32 %v437, %v440
    %v442 = vmul.f32 %v438, %v440
    %v443 = vadd.f32 %v435, %v441
    %v444 = vadd.f32 %v436, %v442
    %v445 = vld [vmem:[%s60] sm:$0xff]
    %v446 = vld [vmem:[%s60 + $0x8] sm:$0xff]
    %s447 = sld [smem:[#allocation2 + $0x105]]
    %v448 = vstv %s447
    %v449 = vmul.f32 %v445, %v448
    %v450 = vmul.f32 %v446, %v448
    %v451 = vadd.f32 %v443, %v449
    %v452 = vadd.f32 %v444, %v450
    %v453 = vld [vmem:[%s70] sm:$0xff]
    %v454 = vld [vmem:[%s70 + $0x8] sm:$0xff]
    %s455 = sld [smem:[#allocation2 + $0x185]]
    %v456 = vstv %s455
    %v457 = vmul.f32 %v453, %v456
    %v458 = vmul.f32 %v454, %v456
    %v459 = vadd.f32 %v451, %v457
    %v460 = vadd.f32 %v452, %v458
    %v461 = vld [vmem:[%s80] sm:$0xff]
    %v462 = vld [vmem:[%s80 + $0x8] sm:$0xff]
    %s463 = sld [smem:[#allocation2 + $0x205]]
    %v464 = vstv %s463
    %v465 = vmul.f32 %v461, %v464
    %v466 = vmul.f32 %v462, %v464
    %v467 = vadd.f32 %v459, %v465
    %v468 = vadd.f32 %v460, %v466
    %v469 = vld [vmem:[%s90] sm:$0xff]
    %v470 = vld [vmem:[%s90 + $0x8] sm:$0xff]
    %s471 = sld [smem:[#allocation2 + $0x285]]
    %v472 = vstv %s471
    %v473 = vmul.f32 %v469, %v472
    %v474 = vmul.f32 %v470, %v472
    %v475 = vadd.f32 %v467, %v473
    %v476 = vadd.f32 %v468, %v474
    %v477 = vld [vmem:[%s100] sm:$0xff]
    %v478 = vld [vmem:[%s100 + $0x8] sm:$0xff]
    %s479 = sld [smem:[#allocation2 + $0x305]]
    %v480 = vstv %s479
    %v481 = vmul.f32 %v477, %v480
    %v482 = vmul.f32 %v478, %v480
    %v483 = vadd.f32 %v475, %v481
    %v484 = vadd.f32 %v476, %v482
    %v485 = vld [vmem:[%s110] sm:$0xff]
    %v486 = vld [vmem:[%s110 + $0x8] sm:$0xff]
    %s487 = sld [smem:[#allocation2 + $0x385]]
    %v488 = vstv %s487
    %v489 = vmul.f32 %v485, %v488
    %v490 = vmul.f32 %v486, %v488
    %v491 = vadd.f32 %v483, %v489
    %v492 = vadd.f32 %v484, %v490
    %vm493 = vcmp.gt.f32.partialorder %v491, 0.0
    %vm494 = vcmp.gt.f32.partialorder %v492, 0.0
    %v495 = vmul.f32 %v491, 0.01
    %v496 = vmul.f32 %v492, 0.01
    %v497 = vsel %vm493, %v491, %v495
    %v498 = vsel %vm494, %v492, %v496
    %s499 = scalar_lea.vmem %s3, %s89
    %500 = vst [vmem:[%s499] sm:$0xff] %v497
    %501 = vst [vmem:[%s499 + $0x8] sm:$0xff] %v498
    // Predicated region
    $region22: #{linear_leaky.1} parent=1 // pred_check
      _
    $region23: #{linear_leaky.1} parent=1 // pred_check_branch
      %503 = sbr.rel (0) target = $region25
    $region24: #{linear_leaky.1} parent=1 // pred_region
      _
    $region25: #{linear_leaky.1} parent=1 // pred_fallthru
      _
    // Predicated region
    $region26: #{linear_leaky.1} parent=1 // pred_check
      _
    $region27: #{linear_leaky.1} parent=1 // pred_check_branch
      %505 = sbr.rel (0) target = $region29
    $region28: #{linear_leaky.1} parent=1 // pred_region
      _
    $region29: #{linear_leaky.1} parent=1 // pred_fallthru
      _
    %506 = vsyncpa [#allocation3], 1
    %507 = vsyncpa [#allocation5], 1

</llo_original>
